<compile_context>
chip_gen: v7x
topology: tpu7x:2x2x1
jax: 0.10.0
libtpu: 0.0.40
codegen_flags: <defaults>
</compile_context>

<pallas_src>
import jax
import jax.numpy as jnp
from jax.experimental import pallas as pl
from jax.experimental.pallas import tpu as pltpu


def _pos_emb_kernel(t_ref, freq_ref, sel_ref, o_ref):
    # t_ref: (TB, 1) f32; freq_ref, sel_ref: (1, D) f32; o_ref: (TB, D) f32.
    ratio = t_ref[...] / freq_ref[...]          # same op as the reference (t / freq)
    s = jnp.sin(ratio)
    c = jnp.cos(ratio)
    o_ref[...] = jnp.where(sel_ref[...] != 0.0, s, c)


def _pick_block_b(B: int, D: int) -> int:
    """Batch tile: ~2 MiB f32 output per buffer, multiple of 8 sublanes."""
    target_rows = max(8, (2 * 1024 * 1024) // (4 * max(D, 1)))
    tb = min(B, target_rows)
    tb = (tb // 8) * 8
    if tb <= 0:
        return B  # tiny batch: single block equal to the full batch dim
    # Prefer a tile that divides B exactly (clean, unmasked stores everywhere).
    while B % tb != 0 and tb > 8:
        tb -= 8
    if B % tb != 0:
        return B
    return tb


def positional_embedding(t: jax.Array, dimension: int) -> jax.Array:
    """t: (B, 1) float -> (B, dimension) float32, interleaved sin/cos."""
    assert t.ndim == 2 and t.shape[1] == 1
    assert dimension % 2 == 0
    t = t.astype(jnp.float32)
    B = t.shape[0]
    D = dimension

    # Trace-time constants, built exactly the way the reference builds them.
    half_idx = jnp.arange(0, D, 2, dtype=jnp.float32)          # (D/2,)
    half_freq = jnp.float32(10000.0) ** (half_idx / jnp.float32(D))
    freq = jnp.repeat(half_freq, 2).reshape(1, D)              # lane 2i, 2i+1 -> f_i
    sel = ((jnp.arange(D, dtype=jnp.int32) % 2) == 0)
    sel = sel.astype(jnp.float32).reshape(1, D)                # 1.0 -> sin, 0.0 -> cos

    tb = _pick_block_b(B, D)
    grid = (pl.cdiv(B, tb),)

    cost = pl.CostEstimate(
        flops=2 * B * D,             # one div + one select per output element
        transcendentals=2 * B * D,   # sin + cos per output element
        bytes_accessed=4 * B * D + 4 * B + 2 * 4 * D,
    )

    return pl.pallas_call(
        _pos_emb_kernel,
        out_shape=jax.ShapeDtypeStruct((B, D), jnp.float32),
        grid_spec=pltpu.PrefetchScalarGridSpec(
            num_scalar_prefetch=0,
            grid=grid,
            in_specs=[
                pl.BlockSpec((tb, 1), lambda i: (i, 0)),
                pl.BlockSpec((1, D), lambda i: (0, 0)),
                pl.BlockSpec((1, D), lambda i: (0, 0)),
            ],
            out_specs=pl.BlockSpec((tb, D), lambda i: (i, 0)),
        ),
        compiler_params=pltpu.CompilerParams(
            dimension_semantics=("parallel",),
        ),
        cost_estimate=cost,
    )(t, freq, sel)
    # TODO(synk): for very small `dimension` (< 128 lanes, like the DIM=32 test)
    # the store is masked / lane-sparse; in production fuse this op into the
    # consuming time-MLP or emit bf16 output if the consumer accepts it.


def _reference(t, dimension):
    # Pure-JAX reference mirroring the PyTorch code.
    idx = jnp.arange(0, dimension, 2, dtype=jnp.float32)
    freq = 10000.0 ** (idx / dimension)
    sin_e = jnp.sin(t / freq)                                  # (B, dim/2)
    cos_e = jnp.cos(t / freq)                                  # (B, dim/2)
    emb = jnp.stack((sin_e, cos_e), axis=1)                    # (B, 2, dim/2)
    emb = jnp.transpose(emb, (0, 2, 1)).reshape(t.shape[0], dimension)
    return emb


if __name__ == "__main__":
    B, DIM = 8, 32
    key = jax.random.PRNGKey(0)
    # Diffusion timesteps as floats, shape (B, 1).
    t = jax.random.uniform(key, (B, 1), dtype=jnp.float32) * 1000.0

    out = positional_embedding(t, DIM)
    out = jax.block_until_ready(out)

    ref = _reference(t, DIM)
    assert out.shape == (B, DIM)
    # Arguments to sin/cos reach ~1e3; fp32 range-reduction / division differ
    # by a few ulps of the *argument* across backends, i.e. ~1e-4 in the output.
    assert jnp.allclose(out, ref, atol=2e-3, rtol=0.0)
    print("KERNEL_OK")
</pallas_src>

<mosaic_0001>
module attributes {stable_mosaic.version = 11 : i64} {
  func.func @_pos_emb_kernel(%arg0: i32, %arg1: memref<8x1xf32, #tpu.memory_space<vmem>>, %arg2: memref<1x32xf32, #tpu.memory_space<vmem>>, %arg3: memref<1x32xf32, #tpu.memory_space<vmem>>, %arg4: memref<8x32xf32, #tpu.memory_space<vmem>>) attributes {dimension_semantics = [#tpu.dimension_semantics<parallel>], iteration_bounds = array<i64: 1>, scalar_prefetch = 0 : i64, scratch_operands = 0 : i64, tpu.core_type = #tpu.core_type<tc>, window_params = [{transform_indices = @transform_0, window_bounds = array<i64: 8, 1>}, {pipeline_mode = #tpu.pipeline_mode<synchronous>, transform_indices = @transform_1, window_bounds = array<i64: 1, 32>}, {pipeline_mode = #tpu.pipeline_mode<synchronous>, transform_indices = @transform_2, window_bounds = array<i64: 1, 32>}, {transform_indices = @transform_3, window_bounds = array<i64: 8, 32>}]} {
    %c0 = arith.constant 0 : index
    %c0_0 = arith.constant 0 : index
    %0 = vector.load %arg1[%c0, %c0_0] : memref<8x1xf32, #tpu.memory_space<vmem>>, vector<8x1xf32>
    %c0_1 = arith.constant 0 : index
    %c0_2 = arith.constant 0 : index
    %1 = vector.load %arg2[%c0_1, %c0_2] : memref<1x32xf32, #tpu.memory_space<vmem>>, vector<1x32xf32>
    %2 = vector.broadcast %0 : vector<8x1xf32> to vector<8x32xf32>
    %3 = vector.broadcast %1 : vector<1x32xf32> to vector<8x32xf32>
    %4 = arith.divf %2, %3 : vector<8x32xf32>
    %5 = math.sin %4 : vector<8x32xf32>
    %6 = math.cos %4 : vector<8x32xf32>
    %c0_3 = arith.constant 0 : index
    %c0_4 = arith.constant 0 : index
    %7 = vector.load %arg3[%c0_3, %c0_4] : memref<1x32xf32, #tpu.memory_space<vmem>>, vector<1x32xf32>
    %cst = arith.constant 0.000000e+00 : f32
    %8 = vector.broadcast %cst : f32 to vector<1x32xf32>
    %9 = arith.cmpf one, %7, %8 : vector<1x32xf32>
    %10 = vector.shape_cast %9 : vector<1x32xi1> to vector<1x32xi1>
    %11 = vector.broadcast %10 : vector<1x32xi1> to vector<8x32xi1>
    %12 = arith.select %11, %5, %6 : vector<8x32xi1>, vector<8x32xf32>
    %c0_5 = arith.constant 0 : index
    %c0_6 = arith.constant 0 : index
    %13 = vector.load %arg4[%c0_5, %c0_6] : memref<8x32xf32, #tpu.memory_space<vmem>>, vector<8x32xf32>
    tpu.vector_store %arg4[%c0_5, %c0_6], %12 {strides = array<i32>} : memref<8x32xf32, #tpu.memory_space<vmem>>, vector<8x32xf32>,
    return
  }
  func.func @transform_0(%arg0: i32) -> (i32, i32) {
    %c0_i32 = arith.constant 0 : i32
    %c0_i32_0 = arith.constant 0 : i32
    return %arg0, %c0_i32 : i32, i32
  }
  func.func @transform_1(%arg0: i32) -> (i32, i32) {
    %c0_i32 = arith.constant 0 : i32
    %c0_i32_0 = arith.constant 0 : i32
    %c0_i32_1 = arith.constant 0 : i32
    return %c0_i32, %c0_i32_0 : i32, i32
  }
  func.func @transform_2(%arg0: i32) -> (i32, i32) {
    %c0_i32 = arith.constant 0 : i32
    %c0_i32_0 = arith.constant 0 : i32
    %c0_i32_1 = arith.constant 0 : i32
    return %c0_i32, %c0_i32_0 : i32, i32
  }
  func.func @transform_3(%arg0: i32) -> (i32, i32) {
    %c0_i32 = arith.constant 0 : i32
    %c0_i32_0 = arith.constant 0 : i32
    return %arg0, %c0_i32 : i32, i32
  }
}

</mosaic_0001>

<llo_original>
// kernel: tpu_custom_call.1
$region0: #{tpu_custom_call.1}
  #allocation0 [shape = 'u32[]', space=smem, size = 0x4, offset = 0x4, fixed_abs, tag = 'smem constant byte address 0x4 - core index']
  #allocation1 [shape = 'u32[144,128]{1,0:T(1,128)}', space=vmem, size = 0x12000, scoped, tag = 'internal scratch']
  %s0 = inlined_call_operand.vmem [shape: f32[8,1], index: 0, kind: input, shape index: {}]
  %s1 = inlined_call_operand.vmem [shape: f32[1,32], index: 1, kind: input, shape index: {}]
  %s2 = inlined_call_operand.vmem [shape: f32[1,32], index: 2, kind: input, shape index: {}]
  %s3 = inlined_call_operand.hbm [shape: f32[8,32], index: 3, kind: output, shape index: {}]
  %s4 = sld [smem:[#allocation0]]
  $region22: #{tpu_custom_call.1} parent=0
    _
  %s6 = ssub.s32 1, %s4
  %s7 = scalar_select 0, %s6, %s4
  $region1: #{tpu_custom_call.1} parent=0
    #allocation2 [shape = 'u8[4096]{0}', space=vmem, size = 0x1000, scoped, tag = 'output window, operand 0, single buffered']
    #allocation3 [shape = 's32[1]{0}', space=sflag, size = 0x4, scoped, tag = 'scoped memory for tpu_custom_call.1']
    %8 = vsyncpa [#allocation3], 0
    // Predicated region
    $region2: #{tpu_custom_call.1} parent=1 // pred_check
      _
    $region3: #{tpu_custom_call.1} parent=1 // pred_check_branch
      %10 = sbr.rel (0) target = $region5
    $region4: #{tpu_custom_call.1} parent=1 // pred_region
      _
    $region5: #{tpu_custom_call.1} parent=1 // pred_fallthru
      _
    // Predicated region
    $region6: #{tpu_custom_call.1} parent=1 // pred_check
      _
    $region7: #{tpu_custom_call.1} parent=1 // pred_check_branch
      %12 = sbr.rel (0) target = $region9
    $region8: #{tpu_custom_call.1} parent=1 // pred_region
      _
    $region9: #{tpu_custom_call.1} parent=1 // pred_fallthru
      _
    // Predicated region
    $region10: #{tpu_custom_call.1} parent=1 // pred_check
      _
    $region11: #{tpu_custom_call.1} parent=1 // pred_check_branch
      %14 = sbr.rel (0) target = $region13
    $region12: #{tpu_custom_call.1} parent=1 // pred_region
      _
    $region13: #{tpu_custom_call.1} parent=1 // pred_fallthru
      _
    %v15 = vld [vmem:[%s0] sm:$0xff]
    %v16 = vld [vmem:[%s1] sm:$0x1]
    %18 = vset.pattern.permute.xlu0 0
    %19 = vperm.xlu0 %18, %v15
    %v20 = vpop.permute.xlu0 %19
    %v23 = vlaneseq
    %v24 = vshrl.u32 %v23, 7
    %v25 = vsub.s32 0, %v24
    %v26 = vrot.slane %v16, %v25
    %v28 = vrcp.pop %v26
    %v29 = vmul.f32 %v20, %v28
    %v30 = vand.u32 2147483647, %v29
    %vm31 = vcmp.le.f32.partialorder %v30, 0.7853982
    %vm32 = vcmp.lt.s32.totalorder %v29, 0
    %v33 = vand.u32 %v29, 2139095040
    %v34 = vshrl.u32 %v33, 23
    %v35 = vsub.s32 %v34, 127
    %v36 = vand.u32 2147483647, %v29
    %v37 = vand.u32 %v36, 8388607
    %v38 = vor.u32 %v37, 8388608
    %v39 = vsub.s32 0, %v38
    %v40 = vadd.s32 %v35, 1
    %vm41 = vcmp.gt.s32.totalorder %v40, 0
    %v42 = vsel %vm41, %v40, 0
    %v43 = vshrl.u32 %v42, 5
    %v44 = vand.u32 %v42, 31
    %v45 = vsub.s32 32, %v44
    %v46 = vshrl.u32 683565275, %v45
    %v47 = vshll.u32 683565275, %v44
    %v48 = vshrl.u32 2475754826, %v45
    %v49 = vor.u32 %v47, %v48
    %v50 = vshll.u32 2475754826, %v44
    %v51 = vshrl.u32 2131351028, %v45
    %v52 = vor.u32 %v50, %v51
    %v53 = vshll.u32 2131351028, %v44
    %v54 = vshrl.u32 2102212464, %v45
    %v55 = vor.u32 %v53, %v54
    %v56 = vshll.u32 2102212464, %v44
    %v57 = vshrl.u32 920167782, %v45
    %v58 = vor.u32 %v56, %v57
    %v59 = vshll.u32 920167782, %v44
    %v60 = vshrl.u32 1326507024, %v45
    %v61 = vor.u32 %v59, %v60
    %vm62 = vcmp.lt.s32.totalorder %v43, 1
    %vm63 = vcmp.lt.s32.totalorder %v43, 2
    %vm64 = vcmp.lt.s32.totalorder %v43, 3
    %vm65 = vcmp.lt.s32.totalorder %v43, 4
    %v66 = vsel %vm62, %v46, %v49
    %v67 = vsel %vm65, %v55, 2102212464
    %v68 = vsel %vm64, %v52, %v67
    %v69 = vsel %vm63, %v66, %v68
    %v70 = vsel %vm62, %v49, %v52
    %v71 = vsel %vm65, %v58, 920167782
    %v72 = vsel %vm64, %v55, %v71
    %v73 = vsel %vm63, %v70, %v72
    %v74 = vsel %vm62, %v52, %v55
    %v75 = vsel %vm65, %v61, 1326507024
    %v76 = vsel %vm64, %v58, %v75
    %v77 = vsel %vm63, %v74, %v76
    %v78 = vshll.u32 %v38, 8
    %v79 = vmul.u32.u64.compose %v78, %v77
    %v80 = vextract.low.u32 %v79
    %v81 = vextract.high.u32 %v79
    %v82 = vmul.u32.u64.compose %v78, %v73
    %v83 = vextract.low.u32 %v82
    %v84 = vextract.high.u32 %v82
    %v85 = vmul.u32 %v78, %v69
    %v86 = vadd.s32 %v81, %v83
    %vm87 = vc.u32 %v81, %v83
    %v88 = vadd.s32 %v84, 1
    %v89 = vsel %vm87, %v88, %v84
    %v90 = vadd.s32 %v85, %v89
    %v91 = vadd.s32 %v90, 536870912
    %v92 = vshrl.u32 %v91, 30
    %v93 = vshll.u32 %v92, 30
    %v94 = vsub.s32 %v90, %v93
    %vm95 = vcmp.lt.s32.totalorder %v94, 0
    %v96 = vsub.s32 0, %v94
    %v97 = vsel %vm95, %v96, %v94
    %v98 = vclz %v97
    %v99 = vsub.s32 %v98, 2
    %vm100 = vcmp.gt.s32.totalorder 0, %v99
    %v101 = vsel %vm100, 0, %v99
    %v102 = vsub.s32 32, %v101
    %v103 = vshll.u32 %v94, %v101
    %v104 = vshrl.u32 %v86, %v102
    %v105 = vor.u32 %v103, %v104
    %v106 = vsub.s32 4294967266, %v101
    %v107 = vadd.s32 %v106, 127
    %v108 = vshll.u32 %v107, 23
    %v109 = vor.u32 4788187, %v108
    %v110 = vand.u32 2147483647, %v109
    %v112 = vcvt.s32.f32 %v105
    %v113 = vmul.f32 %v112, %v110
    %v114 = vxor.u32 %v113, 2147483648
    %v115 = vsel %vm32, %v114, %v113
    %v116 = vsub.s32 4, %v92
    %v117 = vsel %vm32, %v116, %v92
    %v118 = vsel %vm31, %v29, %v115
    %v119 = vsel %vm31, 0, %v117
    %v120 = vcosq.f32.pop %v118
    %v121 = vsinq.f32.pop %v118
    %vm122 = vweird.f32 %v29
    %v123 = vadd.s32 %v119, 3
    %v124 = vand.u32 %v123, 3
    %vm125 = vcmp.lt.s32.totalorder %v124, 2
    %vm126 = vcmp.eq.s32.totalorder %v124, 0
    %v127 = vxor.u32 %v121, 2147483648
    %v128 = vsel %vm126, %v120, %v127
    %vm129 = vcmp.eq.s32.totalorder %v124, 2
    %v130 = vxor.u32 %v120, 2147483648
    %v131 = vsel %vm129, %v130, %v121
    %v132 = vsel %vm125, %v128, %v131
    %v133 = vsel %vm122, nan, %v132
    %v134 = vand.u32 2147483647, %v29
    %vm135 = vcmp.le.f32.partialorder %v134, 0.7853982
    %vm136 = vcmp.lt.s32.totalorder %v29, 0
    %v137 = vand.u32 %v29, 2139095040
    %v138 = vshrl.u32 %v137, 23
    %v139 = vsub.s32 %v138, 127
    %v140 = vand.u32 2147483647, %v29
    %v141 = vand.u32 %v140, 8388607
    %v142 = vor.u32 %v141, 8388608
    %v143 = vsub.s32 0, %v142
    %v144 = vadd.s32 %v139, 1
    %vm145 = vcmp.gt.s32.totalorder %v144, 0
    %v146 = vsel %vm145, %v144, 0
    %v147 = vshrl.u32 %v146, 5
    %v148 = vand.u32 %v146, 31
    %v149 = vsub.s32 32, %v148
    %v150 = vshrl.u32 683565275, %v149
    %v151 = vshll.u32 683565275, %v148
    %v152 = vshrl.u32 2475754826, %v149
    %v153 = vor.u32 %v151, %v152
    %v154 = vshll.u32 2475754826, %v148
    %v155 = vshrl.u32 2131351028, %v149
    %v156 = vor.u32 %v154, %v155
    %v157 = vshll.u32 2131351028, %v148
    %v158 = vshrl.u32 2102212464, %v149
    %v159 = vor.u32 %v157, %v158
    %v160 = vshll.u32 2102212464, %v148
    %v161 = vshrl.u32 920167782, %v149
    %v162 = vor.u32 %v160, %v161
    %v163 = vshll.u32 920167782, %v148
    %v164 = vshrl.u32 1326507024, %v149
    %v165 = vor.u32 %v163, %v164
    %vm166 = vcmp.lt.s32.totalorder %v147, 1
    %vm167 = vcmp.lt.s32.totalorder %v147, 2
    %vm168 = vcmp.lt.s32.totalorder %v147, 3
    %vm169 = vcmp.lt.s32.totalorder %v147, 4
    %v170 = vsel %vm166, %v150, %v153
    %v171 = vsel %vm169, %v159, 2102212464
    %v172 = vsel %vm168, %v156, %v171
    %v173 = vsel %vm167, %v170, %v172
    %v174 = vsel %vm166, %v153, %v156
    %v175 = vsel %vm169, %v162, 920167782
    %v176 = vsel %vm168, %v159, %v175
    %v177 = vsel %vm167, %v174, %v176
    %v178 = vsel %vm166, %v156, %v159
    %v179 = vsel %vm169, %v165, 1326507024
    %v180 = vsel %vm168, %v162, %v179
    %v181 = vsel %vm167, %v178, %v180
    %v182 = vshll.u32 %v142, 8
    %v183 = vmul.u32.u64.compose %v182, %v181
    %v184 = vextract.low.u32 %v183
    %v185 = vextract.high.u32 %v183
    %v186 = vmul.u32.u64.compose %v182, %v177
    %v187 = vextract.low.u32 %v186
    %v188 = vextract.high.u32 %v186
    %v189 = vmul.u32 %v182, %v173
    %v190 = vadd.s32 %v185, %v187
    %vm191 = vc.u32 %v185, %v187
    %v192 = vadd.s32 %v188, 1
    %v193 = vsel %vm191, %v192, %v188
    %v194 = vadd.s32 %v189, %v193
    %v195 = vadd.s32 %v194, 536870912
    %v196 = vshrl.u32 %v195, 30
    %v197 = vshll.u32 %v196, 30
    %v198 = vsub.s32 %v194, %v197
    %vm199 = vcmp.lt.s32.totalorder %v198, 0
    %v200 = vsub.s32 0, %v198
    %v201 = vsel %vm199, %v200, %v198
    %v202 = vclz %v201
    %v203 = vsub.s32 %v202, 2
    %vm204 = vcmp.gt.s32.totalorder 0, %v203
    %v205 = vsel %vm204, 0, %v203
    %v206 = vsub.s32 32, %v205
    %v207 = vshll.u32 %v198, %v205
    %v208 = vshrl.u32 %v190, %v206
    %v209 = vor.u32 %v207, %v208
    %v210 = vsub.s32 4294967266, %v205
    %v211 = vadd.s32 %v210, 127
    %v212 = vshll.u32 %v211, 23
    %v213 = vor.u32 4788187, %v212
    %v214 = vand.u32 2147483647, %v213
    %v216 = vcvt.s32.f32 %v209
    %v217 = vmul.f32 %v216, %v214
    %v218 = vxor.u32 %v217, 2147483648
    %v219 = vsel %vm136, %v218, %v217
    %v220 = vsub.s32 4, %v196
    %v221 = vsel %vm136, %v220, %v196
    %v222 = vsel %vm135, %v29, %v219
    %v223 = vsel %vm135, 0, %v221
    %v224 = vcosq.f32.pop %v222
    %v225 = vsinq.f32.pop %v222
    %vm226 = vweird.f32 %v29
    %v227 = vand.u32 %v223, 3
    %vm228 = vcmp.lt.s32.totalorder %v227, 2
    %vm229 = vcmp.eq.s32.totalorder %v227, 0
    %v230 = vxor.u32 %v225, 2147483648
    %v231 = vsel %vm229, %v224, %v230
    %vm232 = vcmp.eq.s32.totalorder %v227, 2
    %v233 = vxor.u32 %v224, 2147483648
    %v234 = vsel %vm232, %v233, %v225
    %v235 = vsel %vm228, %v231, %v234
    %v236 = vsel %vm226, nan, %v235
    %v237 = vld [vmem:[%s2] sm:$0x1]
    %vm238 = vcmp.ne.f32.partialorder %v237, 0.0
    %v239 = vsel %vm238, 1, 0
    %v240 = vlaneseq
    %v241 = vshrl.u32 %v240, 7
    %v242 = vsub.s32 0, %v241
    %v243 = vrot.slane %v239, %v242
    %vm244 = vcmp.eq.s32.totalorder %v243, 1
    %v245 = vsel %vm244, %v133, %v236
    %vm246 = vcmask 261120
    %247 = vst.msk [vmem:[#allocation2] sm:$0xff] %vm246, %v245
    // Predicated region
    $region14: #{tpu_custom_call.1} parent=1 // pred_check
      _
    $region15: #{tpu_custom_call.1} parent=1 // pred_check_branch
      %249 = sbr.rel (0) target = $region17
    $region16: #{tpu_custom_call.1} parent=1 // pred_region
      %s251 = ssub.s32 128, 128
      %252 = vsyncadd [#allocation3], %s251
      %s254 = sshll.u32 [#allocation2], 4
      %s255 = int_to_ptr.vmem [resolvable:$true] %s254
      %257 = dma.vmem_to_hbm [thread:$0]  %s255, 128, %s3, [#allocation3]
    $region17: #{tpu_custom_call.1} parent=1 // pred_fallthru
      _
    // Predicated region
    $region18: #{tpu_custom_call.1} parent=1 // pred_check
      _
    $region19: #{tpu_custom_call.1} parent=1 // pred_check_branch
      %259 = sbr.rel (0) target = $region21
    $region20: #{tpu_custom_call.1} parent=1 // pred_region
      %260 = dma.done [#allocation3], 128
    $region21: #{tpu_custom_call.1} parent=1 // pred_fallthru
      _
    %261 = vsyncpa [#allocation3], 1

</llo_original>
